<compile_context>
chip_gen: v7x
topology: tpu7x:2x2x1
jax: 0.10.0
libtpu: 0.0.40
codegen_flags: <defaults>
</compile_context>

<pallas_src>
import functools

import jax
import jax.numpy as jnp
from jax import lax
from jax.experimental import pallas as pl
from jax.experimental.pallas import tpu as pltpu

_LANES = 128
_CHUNK_ROWS = 256          # rows per in-kernel sub-chunk (multiple of 8)
_MIN_PALLAS_ROWS = 8       # below this (< 1024 elements) plain jnp is used


def _tpu_config():
    """Per-generation (n_tensorcores, per-input block bytes, vmem limit)."""
    try:
        kind = jax.devices()[0].device_kind.lower()
    except Exception:  # defensive: unknown backend
        kind = ""
    if "v5 lite" in kind or "v5e" in kind or "v5lite" in kind:
        # v5e: ~0.8 TB/s HBM; 2 MiB blocks keep 2x2 buffering well under the
        # 16 MiB scoped-VMEM default.
        return 1, 2 << 20, None
    if "v6" in kind:
        # v6e: single TC, 128 MiB physical VMEM -> big blocks, raised limit.
        return 1, 6 << 20, 64 << 20
    if "7" in kind:
        # v7x: 2 TCs/chip, 64 MiB VMEM/TC, 3.2 TB/s HBM.
        # NOTE: if xprof shows one core idle, switch the leading grid axis to
        # pltpu.CORE_PARALLEL.
        return 2, 6 << 20, 48 << 20
    return 1, 2 << 20, None


def _round_down(v, m):
    return (v // m) * m


def _mse_sum_kernel(x_ref, y_ref, o_ref, *, rows, rpt, chunk, spc, needs_mask):
    """Accumulate sum((x - y)^2) of one (rpt, 128) block into o_ref[p]."""
    p = pl.program_id(0)      # per-TensorCore axis ("parallel")
    i = pl.program_id(1)      # reduction axis ("arbitrary")
    step = p * spc + i
    n_chunks = rpt // chunk   # static

    @pl.when(i == 0)
    def _():
        o_ref[...] = jnp.zeros_like(o_ref)

    def partial_sum(masked):
        def chunk_sum(start, acc):
            x = x_ref[pl.ds(start, chunk), :].astype(jnp.float32)
            y = y_ref[pl.ds(start, chunk), :].astype(jnp.float32)
            d = x - y
            sq = d * d
            if masked:
                local = lax.broadcasted_iota(jnp.int32, (chunk, _LANES), 0)
                grow = step * rpt + start + local
                sq = jnp.where(grow < rows, sq, 0.0)
            # chunk % 8 == 0 -> vreg-wide VPU adds only (no cross-lane reduce).
            return acc + sq.reshape(chunk // 8, 8, _LANES).sum(axis=0)

        init = jnp.zeros((8, _LANES), jnp.float32)
        if n_chunks == 1:
            return chunk_sum(0, init)
        return lax.fori_loop(
            0, n_chunks,
            lambda j, acc: chunk_sum(pl.multiple_of(j * chunk, chunk), acc),
            init)

    if needs_mask:
        is_interior = (step + 1) * rpt <= rows

        @pl.when(is_interior)
        def _():
            o_ref[0] += partial_sum(masked=False)

        @pl.when(jnp.logical_not(is_interior))
        def _():
            o_ref[0] += partial_sum(masked=True)
    else:
        o_ref[0] += partial_sum(masked=False)


def _mse_elem_kernel(x_ref, y_ref, o_ref):
    d = x_ref[...].astype(jnp.float32) - y_ref[...].astype(jnp.float32)
    o_ref[...] = (d * d).astype(o_ref.dtype)


def _mse_none(y_pred, y_true, out_dtype):
    n = int(y_pred.size)
    rows = n // _LANES
    # Ragged / tiny inputs: the elementwise op is trivially fused by XLA at the
    # HBM roofline, so Pallas only handles lane-aligned slabs (per review).
    if n % _LANES != 0 or rows < _MIN_PALLAS_ROWS:
        d = y_pred.astype(jnp.float32) - y_true.astype(jnp.float32)
        return (d * d).astype(out_dtype)

    _, block_bytes, vmem_limit = _tpu_config()
    itemsize = max(jnp.dtype(y_pred.dtype).itemsize,
                   jnp.dtype(y_true.dtype).itemsize,
                   jnp.dtype(out_dtype).itemsize)
    # 3 streams (2 in + 1 out): halve the per-block budget vs the sum path.
    budget_rows = max(8, (block_bytes // 2) // (_LANES * itemsize))
    rpt = rows if rows <= budget_rows else _round_down(budget_rows, 8)

    x2 = y_pred.reshape(rows, _LANES)
    y2 = y_true.reshape(rows, _LANES)

    cp = dict(dimension_semantics=("parallel",))
    if vmem_limit is not None:
        cp["vmem_limit_bytes"] = vmem_limit

    out2 = pl.pallas_call(
        _mse_elem_kernel,
        out_shape=jax.ShapeDtypeStruct((rows, _LANES), out_dtype),
        grid_spec=pltpu.PrefetchScalarGridSpec(
            num_scalar_prefetch=0,
            grid=(pl.cdiv(rows, rpt),),
            in_specs=[
                pl.BlockSpec((rpt, _LANES), lambda i: (i, 0)),
                pl.BlockSpec((rpt, _LANES), lambda i: (i, 0)),
            ],
            out_specs=pl.BlockSpec((rpt, _LANES), lambda i: (i, 0)),
        ),
        compiler_params=pltpu.CompilerParams(**cp),
    )(x2, y2)
    return out2.reshape(y_pred.shape)


def mse_loss(y_pred, y_true, reduction="mean", seq_lens=None):
    del seq_lens  # unused, matches the torch wrapper signature
    assert y_pred.shape == y_true.shape, (y_pred.shape, y_true.shape)
    if reduction not in ("mean", "sum", "none"):
        raise ValueError(f"unsupported reduction: {reduction}")

    out_dtype = jnp.promote_types(y_pred.dtype, y_true.dtype)
    if reduction == "none":
        return _mse_none(y_pred, y_true, out_dtype)

    n = int(y_pred.size)
    n_tc, block_bytes, vmem_limit = _tpu_config()

    flat_p = y_pred.reshape(-1)
    flat_t = y_true.reshape(-1)
    rows = n // _LANES                 # number of full 128-lane rows
    n_main = rows * _LANES

    # <128-element ragged tail in plain jnp (no full-array pad copy).
    tail_sum = jnp.float32(0.0)
    if n_main < n:
        dt = (flat_p[n_main:].astype(jnp.float32)
              - flat_t[n_main:].astype(jnp.float32))
        tail_sum = jnp.sum(dt * dt)

    if rows < _MIN_PALLAS_ROWS:
        # Degenerate tiny input (< 1024 elements): not worth a kernel launch.
        if n_main > 0:
            dm = (flat_p[:n_main].astype(jnp.float32)
                  - flat_t[:n_main].astype(jnp.float32))
            tail_sum = tail_sum + jnp.sum(dm * dm)
        total = tail_sum
    else:
        # Lane-dense slab; when n is 128-aligned this is a pure reshape (no copy).
        x2 = flat_p[:n_main].reshape(rows, _LANES)
        y2 = flat_t[:n_main].reshape(rows, _LANES)

        itemsize = max(jnp.dtype(y_pred.dtype).itemsize,
                       jnp.dtype(y_true.dtype).itemsize)
        budget_rows = max(_CHUNK_ROWS, block_bytes // (_LANES * itemsize))

        if rows < _CHUNK_ROWS:
            chunk = _round_down(rows, 8)       # multiple of 8, <= rows
            rpt = chunk
        else:
            chunk = _CHUNK_ROWS
            rpt = _round_down(min(rows, budget_rows), chunk)

        steps_total = pl.cdiv(rows, rpt)
        n_cores = n_tc if steps_total >= 2 else 1    # v7x 2-TC split only
        spc = pl.cdiv(steps_total, n_cores)          # reduction steps per core
        needs_mask = (rows % rpt != 0) or (n_cores * spc != steps_total)

        def in_index_map(p, i):
            # Clamp so duplicated steps never index past the array; their
            # contribution is zeroed by the in-kernel row mask.
            return (jnp.minimum(p * spc + i, steps_total - 1), 0)

        kernel = functools.partial(
            _mse_sum_kernel, rows=rows, rpt=rpt, chunk=chunk, spc=spc,
            needs_mask=needs_mask)

        cp = dict(dimension_semantics=("parallel", "arbitrary"))
        if vmem_limit is not None:
            cp["vmem_limit_bytes"] = vmem_limit

        partials = pl.pallas_call(
            kernel,
            out_shape=jax.ShapeDtypeStruct((n_cores, 8, _LANES), jnp.float32),
            grid_spec=pltpu.PrefetchScalarGridSpec(
                num_scalar_prefetch=0,
                grid=(n_cores, spc),
                in_specs=[
                    pl.BlockSpec((rpt, _LANES), in_index_map),
                    pl.BlockSpec((rpt, _LANES), in_index_map),
                ],
                out_specs=pl.BlockSpec((1, 8, _LANES), lambda p, i: (p, 0, 0)),
            ),
            compiler_params=pltpu.CompilerParams(**cp),
        )(x2, y2)

        # Single cheap cross-lane reduce done in XLA, plus the jnp tail.
        total = jnp.sum(partials) + tail_sum

    if reduction == "mean":
        total = total / jnp.float32(n)
    return total.astype(out_dtype)


class MSELossWrapper:
    """Pallas-backed equivalent of the torch MSELossWrapper module."""

    def __init__(self, reduction="mean"):
        self.reduction = reduction

    def __call__(self, y_pred, y_true, seq_lens=None):
        return mse_loss(y_pred, y_true, reduction=self.reduction,
                        seq_lens=seq_lens)


if __name__ == "__main__":
    key = jax.random.PRNGKey(0)
    k1, k2, k3, k4 = jax.random.split(key, 4)

    shape = (2, 4, 16, 16)
    y_pred = jax.random.normal(k1, shape, dtype=jnp.float32)
    y_true = jax.random.normal(k2, shape, dtype=jnp.float32)

    loss = MSELossWrapper(reduction="mean")(y_pred, y_true)
    jax.block_until_ready(loss)
    ref_mean = jnp.mean((y_pred - y_true) ** 2)
    assert jnp.allclose(loss, ref_mean, rtol=1e-5, atol=1e-6), (loss, ref_mean)

    loss_sum = MSELossWrapper(reduction="sum")(y_pred, y_true)
    ref_sum = jnp.sum((y_pred - y_true) ** 2)
    assert jnp.allclose(loss_sum, ref_sum, rtol=1e-5, atol=1e-4), (loss_sum,
                                                                   ref_sum)

    loss_none = MSELossWrapper(reduction="none")(y_pred, y_true)
    ref_none = (y_pred - y_true) ** 2
    assert jnp.allclose(loss_none, ref_none, rtol=1e-5, atol=1e-6)

    # Ragged element count (n % 128 != 0): exercises the edge mask + jnp tail.
    rshape = (5, 7, 11, 13)   # 5005 elements -> 39 full rows + 13-elem tail
    y_pred_r = jax.random.normal(k3, rshape, dtype=jnp.float32)
    y_true_r = jax.random.normal(k4, rshape, dtype=jnp.float32)
    loss_r = MSELossWrapper(reduction="mean")(y_pred_r, y_true_r)
    jax.block_until_ready(loss_r)
    ref_r = jnp.mean((y_pred_r - y_true_r) ** 2)
    assert jnp.allclose(loss_r, ref_r, rtol=1e-5, atol=1e-6), (loss_r, ref_r)

    print("KERNEL_OK")
</pallas_src>

<mosaic_0001>
module attributes {stable_mosaic.version = 11 : i64} {
  func.func @_mse_sum_kernel(%arg0: i32, %arg1: i32, %arg2: memref<16x128xf32, #tpu.memory_space<vmem>>, %arg3: memref<16x128xf32, #tpu.memory_space<vmem>>, %arg4: memref<1x8x128xf32, #tpu.memory_space<vmem>>) attributes {dimension_semantics = [#tpu.dimension_semantics<parallel>, #tpu.dimension_semantics<arbitrary>], iteration_bounds = array<i64: 1, 1>, scalar_prefetch = 0 : i64, scratch_operands = 0 : i64, tpu.core_type = #tpu.core_type<tc>, window_params = [{transform_indices = @transform_0, window_bounds = array<i64: 16, 128>}, {transform_indices = @transform_1, window_bounds = array<i64: 16, 128>}, {transform_indices = @transform_2, window_bounds = array<i64: 1, 8, 128>}]} {
    %c0_i32 = arith.constant 0 : i32
    %0 = arith.cmpi eq, %arg1, %c0_i32 : i32
    %1 = arith.extui %0 : i1 to i32
    %c0_i32_0 = arith.constant 0 : i32
    %2 = arith.cmpi ne, %1, %c0_i32_0 : i32
    scf.if %2 {
      %cst_11 = arith.constant 0.000000e+00 : f32
      %17 = vector.broadcast %cst_11 : f32 to vector<1x8x128xf32>
      %c0_12 = arith.constant 0 : index
      %c0_13 = arith.constant 0 : index
      %c0_14 = arith.constant 0 : index
      %18 = vector.load %arg4[%c0_12, %c0_13, %c0_14] : memref<1x8x128xf32, #tpu.memory_space<vmem>>, vector<1x8x128xf32>
      tpu.vector_store %arg4[%c0_12, %c0_13, %c0_14], %17 {strides = array<i32>} : memref<1x8x128xf32, #tpu.memory_space<vmem>>, vector<1x8x128xf32>,
    } else {
    }
    %c0 = arith.constant 0 : index
    %c0_1 = arith.constant 0 : index
    %c0_2 = arith.constant 0 : index
    %3 = vector.load %arg4[%c0, %c0_1, %c0_2] : memref<1x8x128xf32, #tpu.memory_space<vmem>>, vector<1x8x128xf32>
    %4 = vector.shape_cast %3 : vector<1x8x128xf32> to vector<8x128xf32>
    %cst = arith.constant 0.000000e+00 : f32
    %5 = vector.broadcast %cst : f32 to vector<8x128xf32>
    %c0_3 = arith.constant 0 : index
    %c0_4 = arith.constant 0 : index
    %6 = vector.load %arg2[%c0_3, %c0_4] : memref<16x128xf32, #tpu.memory_space<vmem>>, vector<16x128xf32>
    %c0_5 = arith.constant 0 : index
    %c0_6 = arith.constant 0 : index
    %7 = vector.load %arg3[%c0_5, %c0_6] : memref<16x128xf32, #tpu.memory_space<vmem>>, vector<16x128xf32>
    %8 = arith.subf %6, %7 : vector<16x128xf32>
    %9 = arith.mulf %8, %8 : vector<16x128xf32>
    %10 = vector.shape_cast %9 : vector<16x128xf32> to vector<2x8x128xf32>
    %cst_7 = arith.constant dense<0.000000e+00> : vector<8x128xf32>
    %11 = vector.multi_reduction <add>, %10, %cst_7 [0] : vector<2x8x128xf32> to vector<8x128xf32>
    %12 = arith.addf %5, %11 : vector<8x128xf32>
    %13 = arith.addf %4, %12 : vector<8x128xf32>
    %c0_8 = arith.constant 0 : index
    %c0_9 = arith.constant 0 : index
    %c0_10 = arith.constant 0 : index
    %14 = vector.load %arg4[%c0_8, %c0_9, %c0_10] : memref<1x8x128xf32, #tpu.memory_space<vmem>>, vector<1x8x128xf32>
    %15 = vector.shape_cast %14 : vector<1x8x128xf32> to vector<8x128xf32>
    %16 = vector.shape_cast %13 : vector<8x128xf32> to vector<1x8x128xf32>
    tpu.vector_store %arg4[%c0_8, %c0_9, %c0_10], %16 {strides = array<i32>} : memref<1x8x128xf32, #tpu.memory_space<vmem>>, vector<1x8x128xf32>,
    return
  }
  func.func @transform_0(%arg0: i32, %arg1: i32) -> (i32, i32) {
    %c1_i32 = arith.constant 1 : i32
    %0 = arith.muli %arg0, %c1_i32 : i32
    %1 = arith.addi %0, %arg1 : i32
    %c0_i32 = arith.constant 0 : i32
    %2 = arith.minsi %1, %c0_i32 : i32
    %c0_i32_0 = arith.constant 0 : i32
    %c0_i32_1 = arith.constant 0 : i32
    return %2, %c0_i32_0 : i32, i32
  }
  func.func @transform_1(%arg0: i32, %arg1: i32) -> (i32, i32) {
    %c1_i32 = arith.constant 1 : i32
    %0 = arith.muli %arg0, %c1_i32 : i32
    %1 = arith.addi %0, %arg1 : i32
    %c0_i32 = arith.constant 0 : i32
    %2 = arith.minsi %1, %c0_i32 : i32
    %c0_i32_0 = arith.constant 0 : i32
    %c0_i32_1 = arith.constant 0 : i32
    return %2, %c0_i32_0 : i32, i32
  }
  func.func @transform_2(%arg0: i32, %arg1: i32) -> (i32, i32, i32) {
    %c0_i32 = arith.constant 0 : i32
    %c0_i32_0 = arith.constant 0 : i32
    %c0_i32_1 = arith.constant 0 : i32
    return %arg0, %c0_i32, %c0_i32_0 : i32, i32, i32
  }
}

</mosaic_0001>

<llo_original>
// kernel: tpu_custom_call.1
$region0: #{tpu_custom_call.1}
  #allocation0 [shape = 'u32[]', space=smem, size = 0x4, offset = 0x4, fixed_abs, tag = 'smem constant byte address 0x4 - core index']
  #allocation1 [shape = 'u32[144,128]{1,0:T(1,128)}', space=vmem, size = 0x12000, scoped, tag = 'internal scratch']
  %s0 = inlined_call_operand.hbm [shape: f32[16,128], index: 0, kind: input, shape index: {}]
  %s1 = inlined_call_operand.hbm [shape: f32[16,128], index: 1, kind: input, shape index: {}]
  %s2 = inlined_call_operand.hbm [shape: f32[1,8,128], index: 2, kind: output, shape index: {}]
  %s3 = sld [smem:[#allocation0]]
  $region30: #{tpu_custom_call.1} parent=0
    _
  %s5 = ssub.s32 1, %s3
  %s6 = scalar_select 0, %s5, %s3
  $region1: #{tpu_custom_call.1} parent=0
    #allocation2 [shape = 'u8[8192]{0}', space=vmem, size = 0x2000, scoped, tag = 'input window, operand 0, single buffered']
    #allocation3 [shape = 's32[1]{0}', space=sflag, size = 0x4, scoped, tag = 'scoped memory for tpu_custom_call.1']
    #allocation4 [shape = 's32[1]{0}', space=sflag, size = 0x4, scoped, tag = 'scoped memory for tpu_custom_call.1']
    #allocation5 [shape = 'u8[8192]{0}', space=vmem, size = 0x2000, scoped, tag = 'input window, operand 1, single buffered']
    #allocation6 [shape = 's32[1]{0}', space=sflag, size = 0x4, scoped, tag = 'scoped memory for tpu_custom_call.1']
    #allocation7 [shape = 'u8[4096]{0}', space=vmem, size = 0x1000, scoped, tag = 'output window, operand 0, single buffered']
    %7 = vsyncpa [#allocation3], 0
    %8 = vsyncpa [#allocation6], 0
    %9 = vsyncpa [#allocation4], 0
    // Predicated region
    $region2: #{tpu_custom_call.1} parent=1 // pred_check
      _
    $region3: #{tpu_custom_call.1} parent=1 // pred_check_branch
      %11 = sbr.rel (0) target = $region5
    $region4: #{tpu_custom_call.1} parent=1 // pred_region
      %s12 = sadd.s32 0, 0
      %p13 = scmp.lt.s32.totalorder %s12, 0
      %s14 = scalar_select %p13, %s12, 0
      %s15 = smul.u32 2, %s14
      %s17 = ssub.s32 256, 256
      %18 = vsyncadd [#allocation3], %s17
      %s19 = smul.addr %s15, 128
      %s20 = scalar_lea.hbm %s0, %s19
      %s21 = sshll.u32 [#allocation2], 4
      %s22 = int_to_ptr.vmem [resolvable:$true] %s21
      %27 = dma.hbm_to_vmem [thread:$0]  %s20, 256, %s22, [#allocation3], 128, 128, 8
    $region5: #{tpu_custom_call.1} parent=1 // pred_fallthru
      _
    // Predicated region
    $region6: #{tpu_custom_call.1} parent=1 // pred_check
      _
    $region7: #{tpu_custom_call.1} parent=1 // pred_check_branch
      %29 = sbr.rel (0) target = $region9
    $region8: #{tpu_custom_call.1} parent=1 // pred_region
      %s30 = sadd.s32 0, 0
      %p31 = scmp.lt.s32.totalorder %s30, 0
      %s32 = scalar_select %p31, %s30, 0
      %s33 = smul.u32 2, %s32
      %s35 = ssub.s32 256, 256
      %36 = vsyncadd [#allocation6], %s35
      %s37 = smul.addr %s33, 128
      %s38 = scalar_lea.hbm %s1, %s37
      %s39 = sshll.u32 [#allocation5], 4
      %s40 = int_to_ptr.vmem [resolvable:$true] %s39
      %45 = dma.hbm_to_vmem [thread:$0]  %s38, 256, %s40, [#allocation6], 128, 128, 8
    $region9: #{tpu_custom_call.1} parent=1 // pred_fallthru
      _
    // Predicated region
    $region10: #{tpu_custom_call.1} parent=1 // pred_check
      _
    $region11: #{tpu_custom_call.1} parent=1 // pred_check_branch
      %47 = sbr.rel (0) target = $region13
    $region12: #{tpu_custom_call.1} parent=1 // pred_region
      %48 = dma.done [#allocation3], 256
    $region13: #{tpu_custom_call.1} parent=1 // pred_fallthru
      _
    // Predicated region
    $region14: #{tpu_custom_call.1} parent=1 // pred_check
      _
    $region15: #{tpu_custom_call.1} parent=1 // pred_check_branch
      %50 = sbr.rel (0) target = $region17
    $region16: #{tpu_custom_call.1} parent=1 // pred_region
      %51 = dma.done [#allocation6], 256
    $region17: #{tpu_custom_call.1} parent=1 // pred_fallthru
      _
    %s52 = sadd.s32 0, 0
    %p53 = scmp.lt.s32.totalorder %s52, 0
    %s54 = scalar_select %p53, %s52, 0
    %s55 = smul.u32 2, %s54
    %s56 = sadd.s32 0, 0
    %p57 = scmp.lt.s32.totalorder %s56, 0
    %s58 = scalar_select %p57, %s56, 0
    %s59 = smul.u32 2, %s58
    %p60 = scmp.eq.s32.totalorder 0, 0
    // Predicated region
    $region18: #{tpu_custom_call.1} parent=1 // pred_check
      %p61 = pneg %p60
    $region19: #{tpu_custom_call.1} parent=1 // pred_check_branch
      %63 = sbr.rel (%p61) target = $region21
    $region20: #{tpu_custom_call.1} parent=1 // pred_region
      %64 = vst [vmem:[#allocation7] sm:$0xff] 0.0
    $region21: #{tpu_custom_call.1} parent=1 // pred_fallthru
      _
    %v65 = vld [vmem:[#allocation7] sm:$0xff]
    %v66 = vld [vmem:[#allocation2] sm:$0xff]
    %v67 = vld [vmem:[#allocation2 + $0x8] sm:$0xff]
    %v68 = vld [vmem:[#allocation5] sm:$0xff]
    %v69 = vld [vmem:[#allocation5 + $0x8] sm:$0xff]
    %v70 = vsub.f32 %v66, %v68
    %v71 = vsub.f32 %v67, %v69
    %v72 = vmul.f32 %v70, %v70
    %v73 = vmul.f32 %v71, %v71
    %v74 = vadd.f32 %v72, %v73
    %v75 = vadd.f32 %v74, 0.0
    %v76 = vadd.f32 %v65, %v75
    %77 = vst [vmem:[#allocation7] sm:$0xff] %v76
    // Predicated region
    $region22: #{tpu_custom_call.1} parent=1 // pred_check
      _
    $region23: #{tpu_custom_call.1} parent=1 // pred_check_branch
      %79 = sbr.rel (0) target = $region25
    $region24: #{tpu_custom_call.1} parent=1 // pred_region
      %s81 = ssub.s32 128, 128
      %82 = vsyncadd [#allocation4], %s81
      %s84 = sshll.u32 [#allocation7], 4
      %s85 = int_to_ptr.vmem [resolvable:$true] %s84
      %87 = dma.vmem_to_hbm [thread:$0]  %s85, 128, %s2, [#allocation4]
    $region25: #{tpu_custom_call.1} parent=1 // pred_fallthru
      _
    // Predicated region
    $region26: #{tpu_custom_call.1} parent=1 // pred_check
      _
    $region27: #{tpu_custom_call.1} parent=1 // pred_check_branch
      %89 = sbr.rel (0) target = $region29
    $region28: #{tpu_custom_call.1} parent=1 // pred_region
      %90 = dma.done [#allocation4], 128
    $region29: #{tpu_custom_call.1} parent=1 // pred_fallthru
      _
    %91 = vsyncpa [#allocation3], 1
    %92 = vsyncpa [#allocation6], 1
    %93 = vsyncpa [#allocation4], 1

</llo_original>
